<compile_context>
chip_gen: v7x
topology: tpu7x:2x2x1
jax: 0.10.0
libtpu: 0.0.40
codegen_flags: <defaults>
</compile_context>

<pallas_src>
import functools

import numpy as np
import jax
import jax.numpy as jnp
from jax.experimental import pallas as pl
from jax.experimental.pallas import tpu as pltpu


def _round_up(n, m):
    return ((n + m - 1) // m) * m


# --------------------------- parameter preparation ---------------------------

def prepare_params(params, *, num_heads):
    """One-time weight transform (NOT per forward call):
       - fold 1/sqrt(dh) into the wq columns / bq of the fused QKV slab,
       - cast matmul weights to bf16 (MXU-native operands),
       - pad the QKV slab lane dim 3D up to a multiple of 128 (lane-dense
         kernel-1 stores / kernel-2 loads)."""
    w_qkv = np.asarray(params["w_qkv"], np.float32)   # [D, 3D] = [wq | wk | wv]
    b_qkv = np.asarray(params["b_qkv"], np.float32)   # [1, 3D]
    d = w_qkv.shape[0]
    dh = d // num_heads
    scale = 1.0 / np.sqrt(dh)

    w = w_qkv.copy()
    b = b_qkv.copy()
    w[:, :d] *= scale                                  # fold query scale
    b[:, :d] *= scale

    d3p = _round_up(3 * d, 128)
    w_pad = np.zeros((d, d3p), np.float32)
    w_pad[:, :3 * d] = w
    b_pad = np.zeros((1, d3p), np.float32)
    b_pad[:, :3 * d] = b

    return {
        "w_qkv": jnp.asarray(w_pad, jnp.bfloat16),
        "b_qkv": jnp.asarray(b_pad, jnp.float32),
        "wo": jnp.asarray(np.asarray(params["wo"], np.float32), jnp.bfloat16),
        "bo": jnp.asarray(np.asarray(params["bo"], np.float32), jnp.float32),
        "d": d,
        "d3p": d3p,
    }


# ------------------ Kernel 1: fused flat q/k/v in-projection -----------------

def _qkv_proj_kernel(x_ref, w_ref, b_ref, o_ref):
    # x: [tile, D] bf16, w: [D, 3Dp] bf16, b: [1, 3Dp] f32 -> o: [tile, 3Dp] bf16
    acc = jnp.dot(x_ref[...], w_ref[...], preferred_element_type=jnp.float32)
    o_ref[...] = (acc + b_ref[...]).astype(o_ref.dtype)


def qkv_project(x_bf16, w_qkv, b_qkv, *, row_tile=1024):
    """One flat bf16 matmul over the un-padded node rows with the fused slab."""
    n, d = x_bf16.shape
    d3p = w_qkv.shape[1]
    n_pad = _round_up(n, 8)                   # sublane-align the row dim
    tile = min(row_tile, n_pad)
    n_pad = _round_up(n_pad, tile)
    x_pad = jnp.zeros((n_pad, d), x_bf16.dtype).at[:n].set(x_bf16)

    out = pl.pallas_call(
        _qkv_proj_kernel,
        out_shape=jax.ShapeDtypeStruct((n_pad, d3p), jnp.bfloat16),
        grid=(n_pad // tile,),
        in_specs=[
            pl.BlockSpec((tile, d), lambda i: (i, 0)),
            pl.BlockSpec((d, d3p), lambda i: (0, 0)),   # weights stay resident
            pl.BlockSpec((1, d3p), lambda i: (0, 0)),
        ],
        out_specs=pl.BlockSpec((tile, d3p), lambda i: (i, 0)),
        compiler_params=pltpu.CompilerParams(
            dimension_semantics=("parallel",)),
    )(x_pad, w_qkv, b_qkv)
    return out[:n]


# ----------------- Kernel 2: batched masked self-attention -------------------

def _attn_kernel(len_ref, qkv_ref, o_ref, *, num_heads, d, block_b):
    bt, nk, _ = qkv_ref.shape                 # qkv: [Bt, Nk, 3Dp] bf16
    dh = d // num_heads
    base = pl.program_id(0) * block_b         # first graph of this block

    @pl.when(len_ref[base] > 0)               # skip all-padding tail blocks
    def _():
        # Key-padding bias [Bt, 1, Nk] f32 built from SMEM per-graph lengths.
        # NOT broadcast to [Bt, Nq, Nk]; it is added to the scores with an
        # implicit (size-1 sublane) broadcast.  -1e30 stays in f32 only.
        col = jax.lax.broadcasted_iota(jnp.int32, (1, 1, nk), 2)
        rows = [jnp.where(col < len_ref[base + i], 0.0, -1e30)
                .astype(jnp.float32) for i in range(bt)]
        bias = rows[0] if bt == 1 else jnp.concatenate(rows, axis=0)

        ctxs = []
        for h in range(num_heads):
            # Static lane slices straight off the VMEM ref: only one head's
            # q/k/v is ever vreg-resident (1/sqrt(dh) already folded into wq).
            qh = qkv_ref[:, :, h * dh:(h + 1) * dh]               # [Bt,Nk,dh]
            kh = qkv_ref[:, :, d + h * dh:d + (h + 1) * dh]
            vh = qkv_ref[:, :, 2 * d + h * dh:2 * d + (h + 1) * dh]

            s = jnp.einsum("bqd,bkd->bqk", qh, kh,
                           preferred_element_type=jnp.float32)
            s = s + bias                       # implicit broadcast over queries
            m = jnp.max(s, axis=-1, keepdims=True)
            p = jnp.exp(s - m)
            denom = jnp.sum(p, axis=-1, keepdims=True)
            # Zero-length graphs inside a live block give uniform weights over
            # zero values (no NaN path); such rows are dropped by the gather.
            p = p * pl.reciprocal(denom, approx=True)
            ctxs.append(jnp.einsum("bqk,bkd->bqd", p.astype(jnp.bfloat16), vh,
                                   preferred_element_type=jnp.float32))
        # Head concat along lanes -> one full-width store of the context.
        o_ref[...] = jnp.concatenate(ctxs, axis=-1).astype(o_ref.dtype)


def masked_self_attention(qkv_dense, lens, *, num_heads, d, block_b):
    """Per-graph-block masked MHA (q = k = v = dense-batched projected nodes)."""
    b_pad, nk, d3p = qkv_dense.shape
    assert b_pad % block_b == 0
    kernel = functools.partial(_attn_kernel, num_heads=num_heads, d=d,
                               block_b=block_b)
    return pl.pallas_call(
        kernel,
        out_shape=jax.ShapeDtypeStruct((b_pad, nk, d), jnp.bfloat16),
        grid_spec=pltpu.PrefetchScalarGridSpec(
            num_scalar_prefetch=1,            # lens -> SMEM, no vector DMA
            grid=(b_pad // block_b,),
            in_specs=[pl.BlockSpec((block_b, nk, d3p),
                                   lambda b, lens: (b, 0, 0))],
            out_specs=pl.BlockSpec((block_b, nk, d),
                                   lambda b, lens: (b, 0, 0)),
        ),
        compiler_params=pltpu.CompilerParams(
            dimension_semantics=("parallel",),       # split across TCs on v7x
            vmem_limit_bytes=32 * 1024 * 1024),      # headroom beyond v5e's 16MiB default
    )(lens, qkv_dense)


# ---------- Kernel 3: out-projection + bias + residual (real rows only) ------

def _out_proj_kernel(ctx_ref, x_ref, wo_ref, bo_ref, o_ref, *, res):
    y = jnp.dot(ctx_ref[...], wo_ref[...],
                preferred_element_type=jnp.float32) + bo_ref[...]
    if res:
        y = (x_ref[...].astype(jnp.float32) + y) * 0.5
    o_ref[...] = y.astype(o_ref.dtype)


def out_project(ctx_nodes, x, wo, bo, *, res, row_tile=1024):
    n, d = ctx_nodes.shape
    n_pad = _round_up(n, 8)
    tile = min(row_tile, n_pad)
    n_pad = _round_up(n_pad, tile)
    ctx_pad = jnp.zeros((n_pad, d), ctx_nodes.dtype).at[:n].set(ctx_nodes)
    x_pad = jnp.zeros((n_pad, d), jnp.float32).at[:n].set(x.astype(jnp.float32))
    kernel = functools.partial(_out_proj_kernel, res=res)
    out = pl.pallas_call(
        kernel,
        out_shape=jax.ShapeDtypeStruct((n_pad, d), jnp.float32),
        grid=(n_pad // tile,),
        in_specs=[
            pl.BlockSpec((tile, d), lambda i: (i, 0)),
            pl.BlockSpec((tile, d), lambda i: (i, 0)),
            pl.BlockSpec((d, d), lambda i: (0, 0)),
            pl.BlockSpec((1, d), lambda i: (0, 0)),
        ],
        out_specs=pl.BlockSpec((tile, d), lambda i: (i, 0)),
        compiler_params=pltpu.CompilerParams(
            dimension_semantics=("parallel",)),
    )(ctx_pad, x_pad, wo, bo)
    return out[:n]


# ----------------------------------- glue -------------------------------------

def gnn_transformer_forward(x, batch, prep, *, num_heads, res=True, block_b=8):
    """Mirrors GNNTransformer.forward (eval mode)."""
    # TODO(synk): attention dropout (p_dropout) is training-mode only; eval
    # semantics are implemented here.
    n, d = x.shape
    if batch is None:
        batch = jnp.zeros((n,), jnp.int32)
    batch = batch.astype(jnp.int32)

    # Host-side static sizing (eval-script glue; `batch` is concrete here).
    batch_np = np.asarray(jax.device_get(batch))
    num_graphs = int(batch_np.max()) + 1
    counts_np = np.bincount(batch_np, minlength=num_graphs)
    nk = _round_up(max(int(counts_np.max()), 1), 128)      # lane-dense key dim

    # block_b: respect caller cap, keep >=2 parallel grid steps whenever
    # num_graphs >= 2 (v7x second TensorCore + pipelining), and cap so the
    # per-step nk^2 f32 intermediates stay well under scoped VMEM (v5e 16 MiB
    # default, v7x 64 MiB physical).
    bt = max(1, min(block_b, num_graphs))
    if num_graphs >= 2:
        bt = min(bt, max(1, num_graphs // 2))
    vmem_cap = max(1, (8 * 1024 * 1024) // (3 * nk * nk * 4))
    bt = max(1, min(bt, vmem_cap))
    b_pad = _round_up(num_graphs, bt)

    starts_np = np.concatenate([[0], np.cumsum(counts_np)[:-1]])
    pos = jnp.asarray(np.arange(n) - starts_np[batch_np], jnp.int32)

    assert prep["d"] == d
    d3p = prep["d3p"]

    # 1) fused flat q/k/v projection on the un-padded node rows (Pallas, bf16).
    qkv_flat = qkv_project(x.astype(jnp.bfloat16), prep["w_qkv"],
                           prep["b_qkv"])                       # [N, 3Dp] bf16

    # 2) to_dense_batch of the *projected* tokens (scatter: JAX glue), bf16.
    qkv_dense = (jnp.zeros((b_pad, nk, d3p), jnp.bfloat16)
                 .at[batch, pos].set(qkv_flat))
    lens = (jnp.zeros((b_pad,), jnp.int32)
            .at[:num_graphs].set(jnp.asarray(counts_np, jnp.int32)))

    # 3) batched masked self-attention -> per-node context (Pallas).
    ctx_dense = masked_self_attention(qkv_dense, lens, num_heads=num_heads,
                                      d=d, block_b=bt)          # [Bp,nk,D] bf16

    # 4) gather real rows back to node order (JAX glue), then out-projection
    #    + bias + residual average on ONLY the N real rows (Pallas).
    flat_idx = batch * nk + pos
    ctx_nodes = ctx_dense.reshape(b_pad * nk, d)[flat_idx]      # [N, D] bf16
    out = out_project(ctx_nodes, x, prep["wo"], prep["bo"], res=res)
    return jnp.squeeze(out)


# --------------------------- pure-JAX reference --------------------------------

def _reference(x, batch, params, *, num_heads, res=True):
    n, d = x.shape
    batch_np = np.asarray(jax.device_get(batch))
    num_graphs = int(batch_np.max()) + 1
    counts_np = np.bincount(batch_np, minlength=num_graphs)
    nmax = int(counts_np.max())
    starts_np = np.concatenate([[0], np.cumsum(counts_np)[:-1]])
    pos = jnp.asarray(np.arange(n) - starts_np[batch_np], jnp.int32)

    dense = jnp.zeros((num_graphs, nmax, d), jnp.float32).at[batch, pos].set(x)
    mask = jnp.zeros((num_graphs, nmax), bool).at[batch, pos].set(True)

    w, b = params["w_qkv"], params["b_qkv"]
    q = dense @ w[:, :d] + b[:, :d]
    k = dense @ w[:, d:2 * d] + b[:, d:2 * d]
    v = dense @ w[:, 2 * d:] + b[:, 2 * d:]
    h, dh = num_heads, d // num_heads
    qh = q.reshape(num_graphs, nmax, h, dh)
    kh = k.reshape(num_graphs, nmax, h, dh)
    vh = v.reshape(num_graphs, nmax, h, dh)
    s = jnp.einsum("bqhd,bkhd->bhqk", qh, kh) / np.sqrt(dh)
    s = s + jnp.where(mask, 0.0, -1e30)[:, None, None, :]
    p = jax.nn.softmax(s, axis=-1)
    o = jnp.einsum("bhqk,bkhd->bqhd", p, vh).reshape(num_graphs, nmax, d)
    o = o @ params["wo"] + params["bo"]
    sel = o.reshape(num_graphs * nmax, d)[mask.reshape(-1)]
    if res:
        return (jnp.squeeze(x) + jnp.squeeze(sel)) * 0.5
    return jnp.squeeze(sel)


# ------------------------------------ main --------------------------------------

if __name__ == "__main__":
    output_dim, num_heads = 32, 4

    key = jax.random.PRNGKey(0)
    kx, kw, kb, kwo, kbo = jax.random.split(key, 5)

    def init(k, shape, scale=0.1):
        return (jax.random.normal(k, shape) * scale).astype(jnp.float32)

    params = {
        # nn.MultiheadAttention(output_dim, num_heads): fused in-projection
        # slab (columns = [wq | wk | wv]) and the out-projection.
        "w_qkv": init(kw, (output_dim, 3 * output_dim)),
        "b_qkv": init(kb, (1, 3 * output_dim)),
        "wo": init(kwo, (output_dim, output_dim)),
        "bo": init(kbo, (1, output_dim)),
    }
    prep = prepare_params(params, num_heads=num_heads)   # one-time transform

    # 2 graphs: 16 and 12 nodes (graph 1's dense rows are padded -> masked keys).
    batch = jnp.array([0] * 16 + [1] * 12, dtype=jnp.int32)     # [28]
    x = init(kx, (28, output_dim), scale=1.0)                   # [28, 32]

    out = gnn_transformer_forward(x, batch, prep,
                                  num_heads=num_heads, res=True)
    out = jax.block_until_ready(out)

    ref = _reference(x, batch, params, num_heads=num_heads, res=True)
    np.testing.assert_allclose(np.asarray(out), np.asarray(ref),
                               rtol=3e-2, atol=3e-2)   # bf16 MXU operands end-to-end

    print("KERNEL_OK")
</pallas_src>

<mosaic_0001>
module attributes {stable_mosaic.version = 11 : i64} {
  func.func @_qkv_proj_kernel(%arg0: i32, %arg1: memref<32x32xbf16, #tpu.memory_space<vmem>>, %arg2: memref<32x128xbf16, #tpu.memory_space<vmem>>, %arg3: memref<1x128xf32, #tpu.memory_space<vmem>>, %arg4: memref<32x128xbf16, #tpu.memory_space<vmem>>) attributes {dimension_semantics = [#tpu.dimension_semantics<parallel>], iteration_bounds = array<i64: 1>, scalar_prefetch = 0 : i64, scratch_operands = 0 : i64, tpu.core_type = #tpu.core_type<tc>, window_params = [{transform_indices = @transform_0, window_bounds = array<i64: 32, 32>}, {pipeline_mode = #tpu.pipeline_mode<synchronous>, transform_indices = @transform_1, window_bounds = array<i64: 32, 128>}, {pipeline_mode = #tpu.pipeline_mode<synchronous>, transform_indices = @transform_2, window_bounds = array<i64: 1, 128>}, {transform_indices = @transform_3, window_bounds = array<i64: 32, 128>}]} {
    %c0 = arith.constant 0 : index
    %c0_0 = arith.constant 0 : index
    %0 = vector.load %arg1[%c0, %c0_0] : memref<32x32xbf16, #tpu.memory_space<vmem>>, vector<32x32xbf16>
    %c0_1 = arith.constant 0 : index
    %c0_2 = arith.constant 0 : index
    %1 = vector.load %arg2[%c0_1, %c0_2] : memref<32x128xbf16, #tpu.memory_space<vmem>>, vector<32x128xbf16>
    %cst = arith.constant dense<0.000000e+00> : vector<32x128xf32>
    %2 = tpu.matmul %0, %1, %cst {dimension_numbers = #tpu.dot_dimension_numbers<[1], [0], [0], [1], [0, 0, 1, 1], [], []>} : vector<32x32xbf16>, vector<32x128xbf16>, vector<32x128xf32> -> vector<32x128xf32>
    %c0_3 = arith.constant 0 : index
    %c0_4 = arith.constant 0 : index
    %3 = vector.load %arg3[%c0_3, %c0_4] : memref<1x128xf32, #tpu.memory_space<vmem>>, vector<1x128xf32>
    %4 = vector.broadcast %3 : vector<1x128xf32> to vector<32x128xf32>
    %5 = arith.addf %2, %4 : vector<32x128xf32>
    %6 = arith.truncf %5 : vector<32x128xf32> to vector<32x128xbf16>
    %c0_5 = arith.constant 0 : index
    %c0_6 = arith.constant 0 : index
    %7 = vector.load %arg4[%c0_5, %c0_6] : memref<32x128xbf16, #tpu.memory_space<vmem>>, vector<32x128xbf16>
    tpu.vector_store %arg4[%c0_5, %c0_6], %6 {strides = array<i32>} : memref<32x128xbf16, #tpu.memory_space<vmem>>, vector<32x128xbf16>,
    return
  }
  func.func @transform_0(%arg0: i32) -> (i32, i32) {
    %c0_i32 = arith.constant 0 : i32
    %c0_i32_0 = arith.constant 0 : i32
    return %arg0, %c0_i32 : i32, i32
  }
  func.func @transform_1(%arg0: i32) -> (i32, i32) {
    %c0_i32 = arith.constant 0 : i32
    %c0_i32_0 = arith.constant 0 : i32
    %c0_i32_1 = arith.constant 0 : i32
    return %c0_i32, %c0_i32_0 : i32, i32
  }
  func.func @transform_2(%arg0: i32) -> (i32, i32) {
    %c0_i32 = arith.constant 0 : i32
    %c0_i32_0 = arith.constant 0 : i32
    %c0_i32_1 = arith.constant 0 : i32
    return %c0_i32, %c0_i32_0 : i32, i32
  }
  func.func @transform_3(%arg0: i32) -> (i32, i32) {
    %c0_i32 = arith.constant 0 : i32
    %c0_i32_0 = arith.constant 0 : i32
    return %arg0, %c0_i32 : i32, i32
  }
}

</mosaic_0001>

<llo_original>
// kernel: tpu_custom_call.1
$region0: #{tpu_custom_call.1}
  #allocation0 [shape = 'u32[]', space=smem, size = 0x4, offset = 0x4, fixed_abs, tag = 'smem constant byte address 0x4 - core index']
  #allocation1 [shape = 'u32[144,128]{1,0:T(1,128)}', space=vmem, size = 0x12000, scoped, tag = 'internal scratch']
  %s0 = inlined_call_operand.hbm [shape: bf16[32,32], index: 0, kind: input, shape index: {}]
  %s1 = inlined_call_operand.hbm [shape: bf16[32,128], index: 1, kind: input, shape index: {}]
  %s2 = inlined_call_operand.vmem [shape: f32[1,128], index: 2, kind: input, shape index: {}]
  %s3 = inlined_call_operand.hbm [shape: bf16[32,128], index: 3, kind: output, shape index: {}]
  %s4 = sld [smem:[#allocation0]]
  $region30: #{tpu_custom_call.1} parent=0
    _
  %s6 = ssub.s32 1, %s4
  %s7 = scalar_select 0, %s6, %s4
  $region1: #{tpu_custom_call.1} parent=0
    #allocation2 [shape = 'u8[8192]{0}', space=vmem, size = 0x2000, scoped, tag = 'input window, operand 0, single buffered']
    #allocation3 [shape = 's32[1]{0}', space=sflag, size = 0x4, scoped, tag = 'scoped memory for tpu_custom_call.1']
    #allocation4 [shape = 's32[1]{0}', space=sflag, size = 0x4, scoped, tag = 'scoped memory for tpu_custom_call.1']
    #allocation5 [shape = 'u8[8192]{0}', space=vmem, size = 0x2000, scoped, tag = 'input window, operand 1, single buffered']
    #allocation6 [shape = 's32[1]{0}', space=sflag, size = 0x4, scoped, tag = 'scoped memory for tpu_custom_call.1']
    #allocation7 [shape = 'u8[8192]{0}', space=vmem, size = 0x2000, scoped, tag = 'output window, operand 0, single buffered']
    %8 = vsyncpa [#allocation3], 0
    %9 = vsyncpa [#allocation6], 0
    %10 = vsyncpa [#allocation4], 0
    // Predicated region
    $region2: #{tpu_custom_call.1} parent=1 // pred_check
      _
    $region3: #{tpu_custom_call.1} parent=1 // pred_check_branch
      %12 = sbr.rel (0) target = $region5
    $region4: #{tpu_custom_call.1} parent=1 // pred_region
      %s14 = ssub.s32 256, 256
      %15 = vsyncadd [#allocation3], %s14
      %s16 = sshll.u32 [#allocation2], 4
      %s17 = int_to_ptr.vmem [resolvable:$true] %s16
      %22 = dma.hbm_to_vmem [thread:$0]  %s0, 256, %s17, [#allocation3], 64, 64, 4
    $region5: #{tpu_custom_call.1} parent=1 // pred_fallthru
      _
    // Predicated region
    $region6: #{tpu_custom_call.1} parent=1 // pred_check
      _
    $region7: #{tpu_custom_call.1} parent=1 // pred_check_branch
      %24 = sbr.rel (0) target = $region9
    $region8: #{tpu_custom_call.1} parent=1 // pred_region
      %s26 = ssub.s32 256, 256
      %27 = vsyncadd [#allocation6], %s26
      %s28 = sshll.u32 [#allocation5], 4
      %s29 = int_to_ptr.vmem [resolvable:$true] %s28
      %34 = dma.hbm_to_vmem [thread:$0]  %s1, 256, %s29, [#allocation6], 64, 64, 4
    $region9: #{tpu_custom_call.1} parent=1 // pred_fallthru
      _
    // Predicated region
    $region10: #{tpu_custom_call.1} parent=1 // pred_check
      _
    $region11: #{tpu_custom_call.1} parent=1 // pred_check_branch
      %36 = sbr.rel (0) target = $region13
    $region12: #{tpu_custom_call.1} parent=1 // pred_region
      _
    $region13: #{tpu_custom_call.1} parent=1 // pred_fallthru
      _
    // Predicated region
    $region14: #{tpu_custom_call.1} parent=1 // pred_check
      _
    $region15: #{tpu_custom_call.1} parent=1 // pred_check_branch
      %38 = sbr.rel (0) target = $region17
    $region16: #{tpu_custom_call.1} parent=1 // pred_region
      %39 = dma.done [#allocation3], 256
    $region17: #{tpu_custom_call.1} parent=1 // pred_fallthru
      _
    // Predicated region
    $region18: #{tpu_custom_call.1} parent=1 // pred_check
      _
    $region19: #{tpu_custom_call.1} parent=1 // pred_check_branch
      %41 = sbr.rel (0) target = $region21
    $region20: #{tpu_custom_call.1} parent=1 // pred_region
      %42 = dma.done [#allocation6], 256
    $region21: #{tpu_custom_call.1} parent=1 // pred_fallthru
      _
    %v44 = vld [vmem:[#allocation2] sm:$0xf]
    %v45 = vld [vmem:[#allocation2 + $0x4] sm:$0xf]
    %v46 = vld [vmem:[#allocation2 + $0x8] sm:$0xf]
    %v47 = vld [vmem:[#allocation2 + $0xc] sm:$0xf]
    %v48 = vld [vmem:[#allocation5] sm:$0xf]
    %v49 = vld [vmem:[#allocation5 + $0x4] sm:$0xf]
    %v50 = vld [vmem:[#allocation5 + $0x8] sm:$0xf]
    %v51 = vld [vmem:[#allocation5 + $0xc] sm:$0xf]
    %v52 = vld [vmem:[%s2] sm:$0x1]
    %v54 = vlaneseq
    %v55 = vshrl.u32 %v54, 7
    %v56 = vsub.s32 0, %v55
    %v57 = vrot.slane %v52, %v56
    %v63 = vunpack.c.l.b16 %v44
    %v64 = vunpack.c.l.b16 %v45
    %v65 = vunpack.c.l.b16 %v46
    %v66 = vunpack.c.l.b16 %v47
    %v67 = vpack.c.b16 %v64, %v63
    %v68 = vpack.c.b16 %v66, %v65
    %v73 = vunpack.c.l.b16 %v48
    %v74 = vunpack.c.l.b16 %v49
    %v75 = vunpack.c.l.b16 %v50
    %v76 = vunpack.c.l.b16 %v51
    %v77 = vpack.c.b16 %v74, %v73
    %v78 = vpack.c.b16 %v76, %v75
    %vm81 = vcmask 261120
    %v83 = vsel %vm81, %v67, 0
    %v86 = vsel %vm81, %v68, 0
    %88 = vmatprep.subr.bf16.mxu0 0
    %89 = vmatpush1.bf16.msra.mxu0 %v77
    %90 = vmatprep.subr.bf16.mxu0 0
    %91 = vmatpush1.bf16.msra.mxu0 %v78
    %92 = vmatprep.subr.bf16.mxu0 0
    %93 = vmatpush1.bf16.msra.mxu0 0
    %94 = vmatprep.subr.bf16.mxu0 0
    %95 = vmatpush1.bf16.msra.mxu0 0
    %96 = vmatprep.subr.bf16.mxu0 0
    %97 = vmatpush1.bf16.msra.mxu0 0
    %98 = vmatprep.subr.bf16.mxu0 0
    %99 = vmatpush1.bf16.msra.mxu0 0
    %100 = vmatprep.subr.bf16.mxu0 0
    %101 = vmatpush1.bf16.msra.mxu0 0
    %102 = vmatprep.subr.bf16.mxu0 0
    %103 = vmatpush1.bf16.msra.mxu0 0
    %104 = vmatprep.subr.bf16.mxu0 0
    %105 = vmatpush1.bf16.msra.mxu0 0
    %106 = vmatprep.subr.bf16.mxu0 0
    %107 = vmatpush1.bf16.msra.mxu0 0
    %108 = vmatprep.subr.bf16.mxu0 0
    %109 = vmatpush1.bf16.msra.mxu0 0
    %110 = vmatprep.subr.bf16.mxu0 0
    %111 = vmatpush1.bf16.msra.mxu0 0
    %112 = vmatprep.subr.bf16.mxu0 0
    %113 = vmatpush1.bf16.msra.mxu0 0
    %114 = vmatprep.subr.bf16.mxu0 0
    %115 = vmatpush1.bf16.msra.mxu0 0
    %116 = vmatprep.subr.bf16.mxu0 0
    %117 = vmatpush1.bf16.msra.mxu0 0
    %118 = vmatprep.subr.bf16.mxu0 0
    %119 = vmatpush1.bf16.msra.mxu0 0
    %120 = vmatprep.mubr.bf16.mxu0 0
    %121 = vmatmul.mubr.bf16.gmra.mrb[0].mxu0 %v83
    %v122 = vpop.f32.mrb[0].mxu0
    %v123 = vadd.f32 %v57, %v122
    %v124 = vpop.f32.mrb[0].mxu0
    %v125 = vpop.f32.mrb[0].mxu0
    %v126 = vadd.f32 %v57, %v125
    %v127 = vpop.f32.mrb[0].mxu0
    %128 = vmatprep.mubr.bf16.mxu0 0
    %129 = vmatmul.mubr.bf16.gmra.mrb[0].mxu0 %v86
    %v130 = vpop.f32.mrb[0].mxu0
    %v131 = vadd.f32 %v57, %v130
    %v132 = vpop.f32.mrb[0].mxu0
    %v133 = vpop.f32.mrb[0].mxu0
    %v134 = vadd.f32 %v57, %v133
    %v135 = vpop.f32.mrb[0].mxu0
    %136 = vdwg.mxu0
    %v137 = vpack.c.bf16 %v126, %v123
    %v138 = vpack.c.bf16 %v134, %v131
    %v141 = vunpack.c.l.b16 %v137
    %v142 = vunpack.c.h.b16 %v137
    %v143 = vunpack.c.l.b16 %v138
    %v144 = vunpack.c.h.b16 %v138
    %v145 = vpack.c.b16 %v141, %v141
    %v146 = vpack.c.b16 %v142, %v142
    %v147 = vpack.c.b16 %v143, %v143
    %v148 = vpack.c.b16 %v144, %v144
    %153 = vst [vmem:[#allocation7] sm:$0xf] %v145
    %154 = vst [vmem:[#allocation7 + $0x4] sm:$0xf] %v146
    %155 = vst [vmem:[#allocation7 + $0x8] sm:$0xf] %v147
    %156 = vst [vmem:[#allocation7 + $0xc] sm:$0xf] %v148
    // Predicated region
    $region22: #{tpu_custom_call.1} parent=1 // pred_check
      _
    $region23: #{tpu_custom_call.1} parent=1 // pred_check_branch
      %158 = sbr.rel (0) target = $region25
    $region24: #{tpu_custom_call.1} parent=1 // pred_region
      %s160 = ssub.s32 256, 256
      %161 = vsyncadd [#allocation4], %s160
      %s162 = sshll.u32 [#allocation7], 4
      %s163 = int_to_ptr.vmem [resolvable:$true] %s162
      %168 = dma.vmem_to_hbm [thread:$0]  %s163, 256, %s3, [#allocation4], 64, 64, 4
    $region25: #{tpu_custom_call.1} parent=1 // pred_fallthru
      _
    // Predicated region
    $region26: #{tpu_custom_call.1} parent=1 // pred_check
      _
    $region27: #{tpu_custom_call.1} parent=1 // pred_check_branch
      %170 = sbr.rel (0) target = $region29
    $region28: #{tpu_custom_call.1} parent=1 // pred_region
      %171 = dma.done [#allocation4], 256
    $region29: #{tpu_custom_call.1} parent=1 // pred_fallthru
      _
    %172 = vsyncpa [#allocation3], 1
    %173 = vsyncpa [#allocation6], 1
    %174 = vsyncpa [#allocation4], 1

</llo_original>
